<compile_context>
chip_gen: v7x
topology: tpu7x:2x2x1
jax: 0.10.0
libtpu: 0.0.40
codegen_flags: <defaults>
</compile_context>

<pallas_src>
import jax
import jax.numpy as jnp
from jax.experimental import pallas as pl
from jax.experimental.pallas import tpu as pltpu


def fm_kernel(x_ref, out_ref):
    # x_ref: (F, E, tb) block — fields on the leading axis, embedding on sublanes,
    # batch on lanes. out_ref: (1, tb) — batch on lanes (lane-dense, unmasked store).
    x = x_ref[...]                                    # (F, E, tb)
    s = jnp.sum(x, axis=0)                            # (E, tb)  sum over fields (VPU adds)
    ss = jnp.sum(x * x, axis=0)                       # (E, tb)  sum of squares (VPU)
    cross = s * s - ss                                # (E, tb)
    # 0.5 * sum over embedding dim (sublane reduce) -> (1, tb); batch stays on lanes.
    out_ref[...] = 0.5 * jnp.sum(cross, axis=0, keepdims=True)


def _pick_batch_tile(B):
    # Lane-dense tiles (multiples of 128); >=512 rows/step amortizes per-step
    # overhead; <=1024 keeps 2x double-buffered tiles tiny even under v7x's
    # 32 MiB default scoped VMEM.
    for cand in (1024, 512, 256, 128):
        if B % cand == 0:
            return cand
    return B  # small / awkward B: single full-extent block (still a legal BlockSpec).


def fm_pallas(x, *, block_b=None):
    """x: (B, F, E) float32 field embeddings -> (B, 1) FM cross term."""
    B, F, E = x.shape
    # Layout plumbing (wrapper-side, not compute): batch -> lane axis, emb -> sublanes.
    xt = jnp.transpose(x, (1, 2, 0))                  # (F, E, B)

    if block_b is None:
        block_b = _pick_batch_tile(B)
    assert B % block_b == 0, "batch tile must divide the batch"
    grid = (B // block_b,)

    flops = int(B * (3 * F * E + 3 * E))              # field adds + squares (rough)
    bytes_accessed = int(B * F * E * x.dtype.itemsize + B * 4)

    out = pl.pallas_call(
        fm_kernel,
        out_shape=jax.ShapeDtypeStruct((1, B), jnp.float32),
        grid=grid,
        in_specs=[pl.BlockSpec((F, E, block_b), lambda i: (0, 0, i))],
        out_specs=pl.BlockSpec((1, block_b), lambda i: (0, i)),
        compiler_params=pltpu.CompilerParams(
            dimension_semantics=("parallel",),        # shard batch tiles across TCs (v7x)
        ),
        cost_estimate=pl.CostEstimate(
            flops=flops, transcendentals=0, bytes_accessed=bytes_accessed),
    )(xt)
    return out.reshape(B, 1)                          # back to the module's (B, 1) output


def fm_reference(x):
    """Pure-JAX reference mirroring the PyTorch forward."""
    square_of_sum = jnp.square(jnp.sum(x, axis=1, keepdims=True))
    sum_of_square = jnp.sum(x * x, axis=1, keepdims=True)
    cross = square_of_sum - sum_of_square
    return 0.5 * jnp.sum(cross, axis=2)


if __name__ == "__main__":
    k0, k1 = jax.random.split(jax.random.PRNGKey(0), 2)

    # Small case consistent with the module: batch=8, num_fields=4, embedding=8.
    B, F, E = 8, 4, 8
    x = jax.random.normal(k0, (B, F, E), dtype=jnp.float32)
    out = jax.block_until_ready(fm_pallas(x))
    ref = fm_reference(x)
    assert out.shape == (B, 1)
    assert jnp.allclose(out, ref, atol=1e-5, rtol=1e-5), (out, ref)

    # Second case exercising the tiled / parallel batch grid (two lane-dense steps).
    B2, F2, E2 = 256, 5, 16
    x2 = jax.random.normal(k1, (B2, F2, E2), dtype=jnp.float32)
    out2 = jax.block_until_ready(fm_pallas(x2, block_b=128))
    ref2 = fm_reference(x2)
    assert out2.shape == (B2, 1)
    assert jnp.allclose(out2, ref2, atol=1e-4, rtol=1e-4), (out2, ref2)

    print("KERNEL_OK")
</pallas_src>

<mosaic_0001>
module attributes {stable_mosaic.version = 11 : i64} {
  func.func @fm_kernel(%arg0: i32, %arg1: memref<4x8x8xf32, #tpu.memory_space<vmem>>, %arg2: memref<1x8xf32, #tpu.memory_space<vmem>>) attributes {dimension_semantics = [#tpu.dimension_semantics<parallel>], iteration_bounds = array<i64: 1>, scalar_prefetch = 0 : i64, scratch_operands = 0 : i64, tpu.core_type = #tpu.core_type<tc>, window_params = [{transform_indices = @transform_0, window_bounds = array<i64: 4, 8, 8>}, {transform_indices = @transform_1, window_bounds = array<i64: 1, 8>}]} {
    %c0 = arith.constant 0 : index
    %c0_0 = arith.constant 0 : index
    %c0_1 = arith.constant 0 : index
    %0 = vector.load %arg1[%c0, %c0_0, %c0_1] : memref<4x8x8xf32, #tpu.memory_space<vmem>>, vector<4x8x8xf32>
    %cst = arith.constant dense<0.000000e+00> : vector<8x8xf32>
    %1 = vector.multi_reduction <add>, %0, %cst [0] : vector<4x8x8xf32> to vector<8x8xf32>
    %2 = arith.mulf %0, %0 : vector<4x8x8xf32>
    %cst_2 = arith.constant dense<0.000000e+00> : vector<8x8xf32>
    %3 = vector.multi_reduction <add>, %2, %cst_2 [0] : vector<4x8x8xf32> to vector<8x8xf32>
    %4 = arith.mulf %1, %1 : vector<8x8xf32>
    %5 = arith.subf %4, %3 : vector<8x8xf32>
    %cst_3 = arith.constant dense<0.000000e+00> : vector<8xf32>
    %6 = vector.multi_reduction <add>, %5, %cst_3 [0] : vector<8x8xf32> to vector<8xf32>
    %7 = vector.shape_cast %6 : vector<8xf32> to vector<1x8xf32>
    %cst_4 = arith.constant 5.000000e-01 : f32
    %8 = vector.broadcast %cst_4 : f32 to vector<1x8xf32>
    %9 = arith.mulf %8, %7 : vector<1x8xf32>
    %c0_5 = arith.constant 0 : index
    %c0_6 = arith.constant 0 : index
    %10 = vector.load %arg2[%c0_5, %c0_6] : memref<1x8xf32, #tpu.memory_space<vmem>>, vector<1x8xf32>
    tpu.vector_store %arg2[%c0_5, %c0_6], %9 {strides = array<i32>} : memref<1x8xf32, #tpu.memory_space<vmem>>, vector<1x8xf32>,
    return
  }
  func.func @transform_0(%arg0: i32) -> (i32, i32, i32) {
    %c0_i32 = arith.constant 0 : i32
    %c0_i32_0 = arith.constant 0 : i32
    %c0_i32_1 = arith.constant 0 : i32
    return %c0_i32, %c0_i32_0, %arg0 : i32, i32, i32
  }
  func.func @transform_1(%arg0: i32) -> (i32, i32) {
    %c0_i32 = arith.constant 0 : i32
    %c0_i32_0 = arith.constant 0 : i32
    return %c0_i32, %arg0 : i32, i32
  }
}

</mosaic_0001>

<llo_original>
// kernel: tpu_custom_call.1
$region0: #{tpu_custom_call.1}
  #allocation0 [shape = 'u32[]', space=smem, size = 0x4, offset = 0x4, fixed_abs, tag = 'smem constant byte address 0x4 - core index']
  #allocation1 [shape = 'u32[144,128]{1,0:T(1,128)}', space=vmem, size = 0x12000, scoped, tag = 'internal scratch']
  %s0 = inlined_call_operand.hbm [shape: f32[4,8,8], index: 0, kind: input, shape index: {}]
  %s1 = inlined_call_operand.hbm [shape: f32[1,8], index: 1, kind: output, shape index: {}]
  %s2 = sld [smem:[#allocation0]]
  $region18: #{tpu_custom_call.1} parent=0
    _
  %s4 = ssub.s32 1, %s2
  %s5 = scalar_select 0, %s4, %s2
  $region1: #{tpu_custom_call.1} parent=0
    #allocation2 [shape = 'u8[16384]{0}', space=vmem, size = 0x4000, scoped, tag = 'input window, operand 0, single buffered']
    #allocation3 [shape = 's32[1]{0}', space=sflag, size = 0x4, scoped, tag = 'scoped memory for tpu_custom_call.1']
    #allocation4 [shape = 's32[1]{0}', space=sflag, size = 0x4, scoped, tag = 'scoped memory for tpu_custom_call.1']
    #allocation5 [shape = 'u8[512]{0}', space=vmem, size = 0x400, scoped, tag = 'output window, operand 0, single buffered']
    %6 = vsyncpa [#allocation3], 0
    %7 = vsyncpa [#allocation4], 0
    // Predicated region
    $region2: #{tpu_custom_call.1} parent=1 // pred_check
      _
    $region3: #{tpu_custom_call.1} parent=1 // pred_check_branch
      %9 = sbr.rel (0) target = $region5
    $region4: #{tpu_custom_call.1} parent=1 // pred_region
      %s11 = ssub.s32 512, 512
      %12 = vsyncadd [#allocation3], %s11
      %s13 = sshll.u32 [#allocation2], 4
      %s14 = int_to_ptr.vmem [resolvable:$true] %s13
      %19 = dma.hbm_to_vmem [thread:$0]  %s0, 512, %s14, [#allocation3], 128, 128, 8
    $region5: #{tpu_custom_call.1} parent=1 // pred_fallthru
      _
    // Predicated region
    $region6: #{tpu_custom_call.1} parent=1 // pred_check
      _
    $region7: #{tpu_custom_call.1} parent=1 // pred_check_branch
      %21 = sbr.rel (0) target = $region9
    $region8: #{tpu_custom_call.1} parent=1 // pred_region
      %22 = dma.done [#allocation3], 512
    $region9: #{tpu_custom_call.1} parent=1 // pred_fallthru
      _
    %v23 = vld [vmem:[#allocation2] sm:$0xff]
    %v24 = vld [vmem:[#allocation2 + $0x8] sm:$0xff]
    %v25 = vld [vmem:[#allocation2 + $0x10] sm:$0xff]
    %v26 = vld [vmem:[#allocation2 + $0x18] sm:$0xff]
    %vm27 = vcmask 64512
    %v28 = vsel %vm27, %v23, 0.0
    %v29 = vsel %vm27, %v24, 0.0
    %v30 = vadd.f32 %v28, %v29
    %v31 = vsel %vm27, %v25, 0.0
    %v32 = vadd.f32 %v30, %v31
    %v33 = vsel %vm27, %v26, 0.0
    %v34 = vadd.f32 %v32, %v33
    %v35 = vmul.f32 %v23, %v23
    %v36 = vmul.f32 %v24, %v24
    %v37 = vmul.f32 %v25, %v25
    %v38 = vmul.f32 %v26, %v26
    %v39 = vsel %vm27, %v35, 0.0
    %v40 = vsel %vm27, %v36, 0.0
    %v41 = vadd.f32 %v39, %v40
    %v42 = vsel %vm27, %v37, 0.0
    %v43 = vadd.f32 %v41, %v42
    %v44 = vsel %vm27, %v38, 0.0
    %v45 = vadd.f32 %v43, %v44
    %v46 = vmul.f32 %v34, %v34
    %v47 = vsub.f32 %v46, %v45
    %v48 = vsel %vm27, %v47, 0.0
    %v49 = vrot.slane %v48, 4
    %v50 = vadd.f32 %v48, %v49
    %v51 = vrot.slane %v50, 2
    %v52 = vadd.f32 %v50, %v51
    %v53 = vrot.slane %v52, 1
    %v54 = vadd.f32 %v52, %v53
    %v55 = vmul.f32 %v54, 0.5
    %vm56 = vcmask 57344
    %57 = vst.msk [vmem:[#allocation5] sm:$0x1] %vm56, %v55
    // Predicated region
    $region10: #{tpu_custom_call.1} parent=1 // pred_check
      _
    $region11: #{tpu_custom_call.1} parent=1 // pred_check_branch
      %59 = sbr.rel (0) target = $region13
    $region12: #{tpu_custom_call.1} parent=1 // pred_region
      %s61 = ssub.s32 16, 16
      %62 = vsyncadd [#allocation4], %s61
      %s64 = sshll.u32 [#allocation5], 4
      %s65 = int_to_ptr.vmem [resolvable:$true] %s64
      %67 = dma.vmem_to_hbm [thread:$0]  %s65, 16, %s1, [#allocation4]
    $region13: #{tpu_custom_call.1} parent=1 // pred_fallthru
      _
    // Predicated region
    $region14: #{tpu_custom_call.1} parent=1 // pred_check
      _
    $region15: #{tpu_custom_call.1} parent=1 // pred_check_branch
      %69 = sbr.rel (0) target = $region17
    $region16: #{tpu_custom_call.1} parent=1 // pred_region
      %70 = dma.done [#allocation4], 16
    $region17: #{tpu_custom_call.1} parent=1 // pred_fallthru
      _
    %71 = vsyncpa [#allocation3], 1
    %72 = vsyncpa [#allocation4], 1

</llo_original>
